<compile_context>
chip_gen: v6e
topology: v6e:2x2x1
jax: 0.10.0
libtpu: 0.0.40
codegen_flags: <defaults>
</compile_context>

<pallas_src>
import jax
import jax.numpy as jnp
from jax import lax
from jax.experimental import pallas as pl
from jax.experimental.pallas import tpu as pltpu


def _round_up(x, m):
    return (x + m - 1) // m * m


def _simplecnn_kernel(xf_ref, wc_ref, bc_ref, pool_ref, wf_ref, bf_ref, out_ref):
    """One grid step = Bblk samples.

    xf_ref  : [Bblk*H*W, 9*Cin]    bf16  im2col patches (built in wrapper)
    wc_ref  : [9*Cin, Cout_pad]    bf16  conv weights, (kh,kw,cin)-flattened
    bc_ref  : [1, Cout_pad]        f32   conv bias
    pool_ref: [Bpad, Bblk*H*W]     f32   per-sample GAP matrix, pre-scaled 1/HW
    wf_ref  : [Cout_pad, Ncls_pad] f32   classifier weight (lane-padded)
    bf_ref  : [1, Ncls_pad]        f32   classifier bias
    out_ref : [Bpad, Ncls_pad]     f32   logits (rows >= Bblk are bias-only)
    """
    # conv3x3 as a single K=9*Cin MXU matmul (bf16 in, f32 accumulate).
    acc = jnp.dot(xf_ref[...], wc_ref[...], preferred_element_type=jnp.float32)
    # bias + ReLU: one VPU pass over the f32 activations.
    hact = jnp.maximum(acc + bc_ref[...], 0.0)            # [Bblk*HW, Cout_pad]
    # Global average pool fused as a tiny MXU dot (mask + reduce + 1/HW scale).
    pooled = jnp.dot(pool_ref[...], hact,
                     preferred_element_type=jnp.float32)  # [Bpad, Cout_pad]
    # Fused classifier epilogue.
    out_ref[...] = (jnp.dot(pooled, wf_ref[...],
                            preferred_element_type=jnp.float32)
                    + bf_ref[...]).astype(out_ref.dtype)


def scalable_network_forward(x_nchw, params):
    """x_nchw: [B, Cin, H, W] float32 -> logits [B, num_classes] float32."""
    wc, bc, wf, bf = params
    b, cin, h, w = x_nchw.shape
    cout = wc.shape[-1]
    ncls = wf.shape[-1]
    hw = h * w
    k9 = 9 * cin
    cout_pad = _round_up(cout, 128)
    npad = _round_up(ncls, 128)

    # Samples per grid step: keep the per-step f32 activation slab ~<=2 MiB and
    # keep >=2 grid steps so the v7x megacore can split the batch.
    bblk = min(b, max(1, (2 * 1024 * 1024) // (hw * cout_pad * 4)))
    while b % bblk:
        bblk -= 1
    if b // bblk < 2 and bblk > 1:
        bblk = max(1, b // 2)
        while b % bblk:
            bblk -= 1
    steps = b // bblk
    bpad = _round_up(max(bblk, 8), 8)

    # ---- wrapper-side im2col: [steps, Bblk*H*W, 9*Cin] bf16 -----------------
    # (transpose + cast fused into one op; SAME padding (1,1) on H and W)
    x_nhwc = jnp.transpose(x_nchw, (0, 2, 3, 1)).astype(jnp.bfloat16)
    x_pad = jnp.pad(x_nhwc, ((0, 0), (1, 1), (1, 1), (0, 0)))
    patches = jnp.concatenate(
        [x_pad[:, kh:kh + h, kw:kw + w, :] for kh in range(3) for kw in range(3)],
        axis=-1)                                          # [B, H, W, 9*Cin]
    xf = patches.reshape(steps, bblk * hw, k9)

    # Conv weights [3,3,Cin,Cout] -> [9*Cin, Cout_pad] bf16 (lane-padded N);
    # flattening order (kh, kw, cin) matches the patch concatenation above.
    wc_p = jnp.pad(wc, ((0, 0), (0, 0), (0, 0), (0, cout_pad - cout)))
    wc_p = wc_p.reshape(k9, cout_pad).astype(jnp.bfloat16)
    bc_p = jnp.pad(bc, (0, cout_pad - cout)).reshape(1, cout_pad).astype(jnp.float32)

    # Per-sample GAP pooling matrix, pre-scaled by 1/(H*W); rows >= bblk are 0.
    rows = jnp.arange(bpad, dtype=jnp.int32)[:, None]
    cols = jnp.arange(bblk * hw, dtype=jnp.int32)[None, :] // hw
    pool = jnp.where(rows == cols, 1.0 / float(hw), 0.0).astype(jnp.float32)

    # Classifier in f32 (negligible compute, better accuracy), lane-padded.
    wf_p = jnp.pad(wf.astype(jnp.float32),
                   ((0, cout_pad - cout), (0, npad - ncls)))
    bf_p = jnp.pad(bf.astype(jnp.float32), (0, npad - ncls)).reshape(1, npad)

    flops = (2 * b * hw * k9 * cout_pad
             + 2 * steps * bpad * bblk * hw * cout_pad
             + 2 * steps * bpad * cout_pad * npad)
    bytes_accessed = (xf.size * 2 + wc_p.size * 2
                      + (bc_p.size + pool.size + wf_p.size + bf_p.size) * 4
                      + steps * bpad * npad * 4)

    out = pl.pallas_call(
        _simplecnn_kernel,
        out_shape=jax.ShapeDtypeStruct((steps, bpad, npad), jnp.float32),
        grid=(steps,),
        in_specs=[
            # per-step im2col slab (leading step dim squeezed)
            pl.BlockSpec((None, bblk * hw, k9), lambda i: (i, 0, 0)),
            # grid-invariant operands: same block every step
            pl.BlockSpec((k9, cout_pad), lambda i: (0, 0)),
            pl.BlockSpec((1, cout_pad), lambda i: (0, 0)),
            pl.BlockSpec((bpad, bblk * hw), lambda i: (0, 0)),
            pl.BlockSpec((cout_pad, npad), lambda i: (0, 0)),
            pl.BlockSpec((1, npad), lambda i: (0, 0)),
        ],
        out_specs=pl.BlockSpec((None, bpad, npad), lambda i: (i, 0, 0)),
        compiler_params=pltpu.CompilerParams(
            dimension_semantics=("parallel",)),
        cost_estimate=pl.CostEstimate(
            flops=flops, transcendentals=0, bytes_accessed=bytes_accessed),
    )(xf, wc_p, bc_p, pool, wf_p, bf_p)

    # Drop sublane padding rows and lane padding columns.
    return out[:, :bblk, :ncls].reshape(b, ncls)


def _reference_forward(x_nchw, params):
    """Plain-JAX f32 reference for correctness checking."""
    wc, bc, wf, bf = params
    x_nhwc = jnp.transpose(x_nchw, (0, 2, 3, 1))
    y = lax.conv_general_dilated(
        x_nhwc, wc, window_strides=(1, 1), padding="SAME",
        dimension_numbers=("NHWC", "HWIO", "NHWC"))
    y = jnp.maximum(y + bc, 0.0)
    pooled = jnp.mean(y, axis=(1, 2))
    return pooled @ wf + bf


if __name__ == "__main__":
    B, Cin, H, W = 2, 4, 16, 16
    Cout, NUM_CLASSES = 8, 10

    key = jax.random.PRNGKey(0)
    kx, kwc, kbc, kwf, kbf = jax.random.split(key, 5)

    x = jax.random.normal(kx, (B, Cin, H, W), dtype=jnp.float32)
    wc = 0.1 * jax.random.normal(kwc, (3, 3, Cin, Cout), dtype=jnp.float32)
    bc = 0.1 * jax.random.normal(kbc, (Cout,), dtype=jnp.float32)
    wf = 0.1 * jax.random.normal(kwf, (Cout, NUM_CLASSES), dtype=jnp.float32)
    bf = 0.1 * jax.random.normal(kbf, (NUM_CLASSES,), dtype=jnp.float32)
    params = (wc, bc, wf, bf)

    out = jax.block_until_ready(scalable_network_forward(x, params))
    ref = jax.block_until_ready(_reference_forward(x, params))

    assert out.shape == (B, NUM_CLASSES)
    # bf16 MXU operands (f32 accumulation) -> compare with bf16-level tolerance.
    assert jnp.allclose(out, ref, atol=2e-2, rtol=2e-2), "mismatch vs reference"

    print("KERNEL_OK")
</pallas_src>

<mosaic_0001>
module attributes {stable_mosaic.version = 11 : i64} {
  func.func @_simplecnn_kernel(%arg0: i32, %arg1: memref<1x256x36xbf16, #tpu.memory_space<vmem>>, %arg2: memref<36x128xbf16, #tpu.memory_space<vmem>>, %arg3: memref<1x128xf32, #tpu.memory_space<vmem>>, %arg4: memref<8x256xf32, #tpu.memory_space<vmem>>, %arg5: memref<128x128xf32, #tpu.memory_space<vmem>>, %arg6: memref<1x128xf32, #tpu.memory_space<vmem>>, %arg7: memref<1x8x128xf32, #tpu.memory_space<vmem>>) attributes {dimension_semantics = [#tpu.dimension_semantics<parallel>], iteration_bounds = array<i64: 2>, scalar_prefetch = 0 : i64, scratch_operands = 0 : i64, tpu.core_type = #tpu.core_type<tc>, window_params = [{transform_indices = @transform_0, window_bounds = array<i64: 1, 256, 36>}, {pipeline_mode = #tpu.pipeline_mode<synchronous>, transform_indices = @transform_1, window_bounds = array<i64: 36, 128>}, {pipeline_mode = #tpu.pipeline_mode<synchronous>, transform_indices = @transform_2, window_bounds = array<i64: 1, 128>}, {pipeline_mode = #tpu.pipeline_mode<synchronous>, transform_indices = @transform_3, window_bounds = array<i64: 8, 256>}, {pipeline_mode = #tpu.pipeline_mode<synchronous>, transform_indices = @transform_4, window_bounds = array<i64: 128, 128>}, {pipeline_mode = #tpu.pipeline_mode<synchronous>, transform_indices = @transform_5, window_bounds = array<i64: 1, 128>}, {transform_indices = @transform_6, window_bounds = array<i64: 1, 8, 128>}]} {
    %c0 = arith.constant 0 : index
    %c0_0 = arith.constant 0 : index
    %c0_1 = arith.constant 0 : index
    %0 = vector.load %arg1[%c0, %c0_0, %c0_1] : memref<1x256x36xbf16, #tpu.memory_space<vmem>>, vector<1x256x36xbf16>
    %1 = vector.shape_cast %0 : vector<1x256x36xbf16> to vector<256x36xbf16>
    %c0_2 = arith.constant 0 : index
    %c0_3 = arith.constant 0 : index
    %2 = vector.load %arg2[%c0_2, %c0_3] : memref<36x128xbf16, #tpu.memory_space<vmem>>, vector<36x128xbf16>
    %cst = arith.constant dense<0.000000e+00> : vector<256x128xf32>
    %3 = tpu.matmul %1, %2, %cst {dimension_numbers = #tpu.dot_dimension_numbers<[1], [0], [0], [1], [0, 0, 1, 1], [], []>} : vector<256x36xbf16>, vector<36x128xbf16>, vector<256x128xf32> -> vector<256x128xf32>
    %c0_4 = arith.constant 0 : index
    %c0_5 = arith.constant 0 : index
    %4 = vector.load %arg3[%c0_4, %c0_5] : memref<1x128xf32, #tpu.memory_space<vmem>>, vector<1x128xf32>
    %5 = vector.broadcast %4 : vector<1x128xf32> to vector<256x128xf32>
    %6 = arith.addf %3, %5 : vector<256x128xf32>
    %cst_6 = arith.constant 0.000000e+00 : f32
    %7 = vector.broadcast %cst_6 : f32 to vector<256x128xf32>
    %8 = arith.maximumf %6, %7 : vector<256x128xf32>
    %c0_7 = arith.constant 0 : index
    %c0_8 = arith.constant 0 : index
    %9 = vector.load %arg4[%c0_7, %c0_8] : memref<8x256xf32, #tpu.memory_space<vmem>>, vector<8x256xf32>
    %cst_9 = arith.constant dense<0.000000e+00> : vector<8x128xf32>
    %10 = tpu.matmul %9, %8, %cst_9 {dimension_numbers = #tpu.dot_dimension_numbers<[1], [0], [0], [1], [0, 0, 1, 1], [], []>} : vector<8x256xf32>, vector<256x128xf32>, vector<8x128xf32> -> vector<8x128xf32>
    %c0_10 = arith.constant 0 : index
    %c0_11 = arith.constant 0 : index
    %11 = vector.load %arg5[%c0_10, %c0_11] : memref<128x128xf32, #tpu.memory_space<vmem>>, vector<128x128xf32>
    %cst_12 = arith.constant dense<0.000000e+00> : vector<8x128xf32>
    %12 = tpu.matmul %10, %11, %cst_12 {dimension_numbers = #tpu.dot_dimension_numbers<[1], [0], [0], [1], [0, 0, 1, 1], [], []>} : vector<8x128xf32>, vector<128x128xf32>, vector<8x128xf32> -> vector<8x128xf32>
    %c0_13 = arith.constant 0 : index
    %c0_14 = arith.constant 0 : index
    %13 = vector.load %arg6[%c0_13, %c0_14] : memref<1x128xf32, #tpu.memory_space<vmem>>, vector<1x128xf32>
    %14 = vector.broadcast %13 : vector<1x128xf32> to vector<8x128xf32>
    %15 = arith.addf %12, %14 : vector<8x128xf32>
    %c0_15 = arith.constant 0 : index
    %c0_16 = arith.constant 0 : index
    %c0_17 = arith.constant 0 : index
    %16 = vector.load %arg7[%c0_15, %c0_16, %c0_17] : memref<1x8x128xf32, #tpu.memory_space<vmem>>, vector<1x8x128xf32>
    %17 = vector.shape_cast %16 : vector<1x8x128xf32> to vector<8x128xf32>
    %18 = vector.shape_cast %15 : vector<8x128xf32> to vector<1x8x128xf32>
    tpu.vector_store %arg7[%c0_15, %c0_16, %c0_17], %18 {strides = array<i32>} : memref<1x8x128xf32, #tpu.memory_space<vmem>>, vector<1x8x128xf32>,
    return
  }
  func.func @transform_0(%arg0: i32) -> (i32, i32, i32) {
    %c0_i32 = arith.constant 0 : i32
    %c0_i32_0 = arith.constant 0 : i32
    %c0_i32_1 = arith.constant 0 : i32
    return %arg0, %c0_i32, %c0_i32_0 : i32, i32, i32
  }
  func.func @transform_1(%arg0: i32) -> (i32, i32) {
    %c0_i32 = arith.constant 0 : i32
    %c0_i32_0 = arith.constant 0 : i32
    %c0_i32_1 = arith.constant 0 : i32
    return %c0_i32, %c0_i32_0 : i32, i32
  }
  func.func @transform_2(%arg0: i32) -> (i32, i32) {
    %c0_i32 = arith.constant 0 : i32
    %c0_i32_0 = arith.constant 0 : i32
    %c0_i32_1 = arith.constant 0 : i32
    return %c0_i32, %c0_i32_0 : i32, i32
  }
  func.func @transform_3(%arg0: i32) -> (i32, i32) {
    %c0_i32 = arith.constant 0 : i32
    %c0_i32_0 = arith.constant 0 : i32
    %c0_i32_1 = arith.constant 0 : i32
    return %c0_i32, %c0_i32_0 : i32, i32
  }
  func.func @transform_4(%arg0: i32) -> (i32, i32) {
    %c0_i32 = arith.constant 0 : i32
    %c0_i32_0 = arith.constant 0 : i32
    %c0_i32_1 = arith.constant 0 : i32
    return %c0_i32, %c0_i32_0 : i32, i32
  }
  func.func @transform_5(%arg0: i32) -> (i32, i32) {
    %c0_i32 = arith.constant 0 : i32
    %c0_i32_0 = arith.constant 0 : i32
    %c0_i32_1 = arith.constant 0 : i32
    return %c0_i32, %c0_i32_0 : i32, i32
  }
  func.func @transform_6(%arg0: i32) -> (i32, i32, i32) {
    %c0_i32 = arith.constant 0 : i32
    %c0_i32_0 = arith.constant 0 : i32
    %c0_i32_1 = arith.constant 0 : i32
    return %arg0, %c0_i32, %c0_i32_0 : i32, i32, i32
  }
}

</mosaic_0001>

<llo_original>
// kernel: tpu_custom_call.1
$region0: #{tpu_custom_call.1}
  #allocation0 [shape = 'u32[]', space=smem, size = 0x4, offset = 0x4, fixed_abs, tag = 'smem constant byte address 0x4 - core index']
  #allocation1 [shape = 'u32[144,128]{1,0:T(1,128)}', space=vmem, size = 0x12000, scoped, tag = 'internal scratch']
  %s0 = inlined_call_operand.vmem [shape: bf16[2,256,36], index: 0, kind: input, shape index: {}]
  %s1 = inlined_call_operand.vmem [shape: bf16[36,128], index: 1, kind: input, shape index: {}]
  %s2 = inlined_call_operand.vmem [shape: f32[1,128], index: 2, kind: input, shape index: {}]
  %s3 = inlined_call_operand.vmem [shape: f32[8,256], index: 3, kind: input, shape index: {}]
  %s4 = inlined_call_operand.vmem [shape: f32[128,128], index: 4, kind: input, shape index: {}]
  %s5 = inlined_call_operand.vmem [shape: f32[1,128], index: 5, kind: input, shape index: {}]
  %s6 = inlined_call_operand.hbm [shape: f32[2,8,128], index: 6, kind: output, shape index: {}]
  %s7 = sld [smem:[#allocation0]]
  $region57: #{tpu_custom_call.1} parent=0
    _
  %s9 = ssub.s32 1, %s7
  %s10 = scalar_select 0, %s9, %s7
  $region1: #{tpu_custom_call.1} parent=0
    #allocation2 [shape = 'u8[8192]{0}', space=vmem, size = 0x2000, scoped, tag = 'output window, operand 0']
    #allocation3 [shape = 's32[2]{0}', space=sflag, size = 0x8, scoped, tag = 'scoped memory for tpu_custom_call.1']
    %11 = vsyncpa [#allocation3], 0
    %s12 = scalar_lea.sflag [#allocation3], 1
    %13 = vsyncpa %s12, 0
    loop: start=0, step=1, limit=4
    $region2: #{tpu_custom_call.1} parent=1 // loop_pre_header
      _
    $region3: #{tpu_custom_call.1} parent=1 // loop_header
      %s15 = sphi 0, %s19
      %p16 = scmp.ge.s32.totalorder %s15, 4
      %s25 = sphi 0, %s27
      %s28 = sphi 0, %s25
      %s29 = sphi 0, %s28
      %s45 = sphi 0, %s29
      %s49 = sphi 0, %s49
      %s51 = sphi 0, %s49
      %s52 = sphi 0, %s51
      %s66 = sphi 0, %s52
      %s70 = sphi 0, %s70
      %s72 = sphi 0, %s70
      %s73 = sphi 0, %s72
      %s87 = sphi 0, %s73
      %s91 = sphi 0, %s91
      %s93 = sphi 0, %s91
      %s94 = sphi 0, %s93
      %s108 = sphi 0, %s94
      %s112 = sphi 0, %s112
      %s114 = sphi 0, %s112
      %s115 = sphi 0, %s114
      %s129 = sphi 0, %s115
      %s133 = sphi 0, %s133
      %s135 = sphi 0, %s133
      %s136 = sphi 0, %s135
      %s150 = sphi 0, %s136
      %s156 = sphi 0, %s158
      %s159 = sphi 0, %s156
      %s160 = sphi 0, %s159
      %s176 = sphi 0, %s160
    $region4: #{tpu_custom_call.1} parent=1 // loop_header_branch
      %18 = sbr.rel (%p16) target = $region8
    $region5: #{tpu_custom_call.1} parent=1 // loop_body
      %s20 = ssub.s32 %s15, 1
      %s21 = ssub.s32 %s15, 2
      %s22 = sadd.s32 %s15, 1
      %s23 = ssub.s32 %s15, %s22
      %p24 = scmp.eq.s32.totalorder %s23, 0
      %s26 = sadd.s32 %s25, 1
      %s27 = scalar_select %p24, %s25, %s26
      %p30 = pneg %p24
      %p31 = scmp.eq.s32.totalorder %s15, 1
      %p32 = por %p30, %p31
      %p33 = scmp.ne.s32.totalorder %s25, %s28
      %p34 = scmp.eq.s32.totalorder %s15, 0
      %p35 = por %p33, %p34
      %p36 = scmp.ne.s32.totalorder %s25, %s28
      %p37 = scmp.eq.s32.totalorder %s20, 1
      %p38 = por %p36, %p37
      %p39 = scmp.ne.s32.totalorder %s28, %s29
      %p40 = scmp.eq.s32.totalorder %s20, 0
      %p41 = por %p39, %p40
      %p42 = scmp.ne.s32.totalorder %s28, %s29
      %p43 = scmp.eq.s32.totalorder %s21, 1
      %p44 = por %p42, %p43
      %p46 = scmp.ne.s32.totalorder %s29, %s45
      %p47 = scmp.eq.s32.totalorder %s21, 0
      %p48 = por %p46, %p47
      %s50 = sadd.s32 %s49, 1
      %p53 = scmp.eq.s32.totalorder %s15, 1
      %p54 = scmp.ne.s32.totalorder %s49, %s51
      %p55 = scmp.eq.s32.totalorder %s15, 0
      %p56 = por %p54, %p55
      %p57 = scmp.ne.s32.totalorder %s49, %s51
      %p58 = scmp.eq.s32.totalorder %s20, 1
      %p59 = por %p57, %p58
      %p60 = scmp.ne.s32.totalorder %s51, %s52
      %p61 = scmp.eq.s32.totalorder %s20, 0
      %p62 = por %p60, %p61
      %p63 = scmp.ne.s32.totalorder %s51, %s52
      %p64 = scmp.eq.s32.totalorder %s21, 1
      %p65 = por %p63, %p64
      %p67 = scmp.ne.s32.totalorder %s52, %s66
      %p68 = scmp.eq.s32.totalorder %s21, 0
      %p69 = por %p67, %p68
      %s71 = sadd.s32 %s70, 1
      %p74 = scmp.eq.s32.totalorder %s15, 1
      %p75 = scmp.ne.s32.totalorder %s70, %s72
      %p76 = scmp.eq.s32.totalorder %s15, 0
      %p77 = por %p75, %p76
      %p78 = scmp.ne.s32.totalorder %s70, %s72
      %p79 = scmp.eq.s32.totalorder %s20, 1
      %p80 = por %p78, %p79
      %p81 = scmp.ne.s32.totalorder %s72, %s73
      %p82 = scmp.eq.s32.totalorder %s20, 0
      %p83 = por %p81, %p82
      %p84 = scmp.ne.s32.totalorder %s72, %s73
      %p85 = scmp.eq.s32.totalorder %s21, 1
      %p86 = por %p84, %p85
      %p88 = scmp.ne.s32.totalorder %s73, %s87
      %p89 = scmp.eq.s32.totalorder %s21, 0
      %p90 = por %p88, %p89
      %s92 = sadd.s32 %s91, 1
      %p95 = scmp.eq.s32.totalorder %s15, 1
      %p96 = scmp.ne.s32.totalorder %s91, %s93
      %p97 = scmp.eq.s32.totalorder %s15, 0
      %p98 = por %p96, %p97
      %p99 = scmp.ne.s32.totalorder %s91, %s93
      %p100 = scmp.eq.s32.totalorder %s20, 1
      %p101 = por %p99, %p100
      %p102 = scmp.ne.s32.totalorder %s93, %s94
      %p103 = scmp.eq.s32.totalorder %s20, 0
      %p104 = por %p102, %p103
      %p105 = scmp.ne.s32.totalorder %s93, %s94
      %p106 = scmp.eq.s32.totalorder %s21, 1
      %p107 = por %p105, %p106
      %p109 = scmp.ne.s32.totalorder %s94, %s108
      %p110 = scmp.eq.s32.totalorder %s21, 0
      %p111 = por %p109, %p110
      %s113 = sadd.s32 %s112, 1
      %p116 = scmp.eq.s32.totalorder %s15, 1
      %p117 = scmp.ne.s32.totalorder %s112, %s114
      %p118 = scmp.eq.s32.totalorder %s15, 0
      %p119 = por %p117, %p118
      %p120 = scmp.ne.s32.totalorder %s112, %s114
      %p121 = scmp.eq.s32.totalorder %s20, 1
      %p122 = por %p120, %p121
      %p123 = scmp.ne.s32.totalorder %s114, %s115
      %p124 = scmp.eq.s32.totalorder %s20, 0
      %p125 = por %p123, %p124
      %p126 = scmp.ne.s32.totalorder %s114, %s115
      %p127 = scmp.eq.s32.totalorder %s21, 1
      %p128 = por %p126, %p127
      %p130 = scmp.ne.s32.totalorder %s115, %s129
      %p131 = scmp.eq.s32.totalorder %s21, 0
      %p132 = por %p130, %p131
      %s134 = sadd.s32 %s133, 1
      %p137 = scmp.eq.s32.totalorder %s15, 1
      %p138 = scmp.ne.s32.totalorder %s133, %s135
      %p139 = scmp.eq.s32.totalorder %s15, 0
      %p140 = por %p138, %p139
      %p141 = scmp.ne.s32.totalorder %s133, %s135
      %p142 = scmp.eq.s32.totalorder %s20, 1
      %p143 = por %p141, %p142
      %p144 = scmp.ne.s32.totalorder %s135, %s136
      %p145 = scmp.eq.s32.totalorder %s20, 0
      %p146 = por %p144, %p145
      %p147 = scmp.ne.s32.totalorder %s135, %s136
      %p148 = scmp.eq.s32.totalorder %s21, 1
      %p149 = por %p147, %p148
      %p151 = scmp.ne.s32.totalorder %s136, %s150
      %p152 = scmp.eq.s32.totalorder %s21, 0
      %p153 = por %p151, %p152
      %s154 = ssub.s32 %s15, %s22
      %p155 = scmp.eq.s32.totalorder %s154, 0
      %s157 = sadd.s32 %s156, 1
      %s158 = scalar_select %p155, %s156, %s157
      %p161 = pneg %p155
      %p162 = scmp.eq.s32.totalorder %s15, 1
      %p163 = por %p161, %p162
      %p164 = scmp.ne.s32.totalorder %s156, %s159
      %p165 = scmp.eq.s32.totalorder %s15, 0
      %p166 = por %p164, %p165
      %p167 = scmp.ne.s32.totalorder %s156, %s159
      %p168 = scmp.eq.s32.totalorder %s20, 1
      %p169 = por %p167, %p168
      %p170 = scmp.ne.s32.totalorder %s159, %s160
      %p171 = scmp.eq.s32.totalorder %s20, 0
      %p172 = por %p170, %p171
      %p173 = scmp.ne.s32.totalorder %s159, %s160
      %p174 = scmp.eq.s32.totalorder %s21, 1
      %p175 = por %p173, %p174
      %p177 = scmp.ne.s32.totalorder %s160, %s176
      %p178 = scmp.eq.s32.totalorder %s21, 0
      %p179 = por %p177, %p178
      %p180 = scmp.le.s32.totalorder 1, %s15
      %p181 = scmp.lt.s32.totalorder %s15, 3
      %p182 = pnand %p180, %p181
      %p183 = pneg %p182
      // Predicated region
      $region9: #{tpu_custom_call.1} parent=5 // pred_check
        _
      $region10: #{tpu_custom_call.1} parent=5 // pred_check_branch
        %185 = sbr.rel (%p182) target = $region12
      $region11: #{tpu_custom_call.1} parent=5 // pred_region
        %s186 = ssub.s32 %s15, 1
        // Predicated region
        $region13: #{tpu_custom_call.1} parent=11 // pred_check
          %p187 = pneg %p62
        $region14: #{tpu_custom_call.1} parent=11 // pred_check_branch
          %189 = sbr.rel (%p187) target = $region16
        $region15: #{tpu_custom_call.1} parent=11 // pred_region
          _
        $region16: #{tpu_custom_call.1} parent=11 // pred_fallthru
          _
        // Predicated region
        $region17: #{tpu_custom_call.1} parent=11 // pred_check
          %p190 = pneg %p83
        $region18: #{tpu_custom_call.1} parent=11 // pred_check_branch
          %192 = sbr.rel (%p190) target = $region20
        $region19: #{tpu_custom_call.1} parent=11 // pred_region
          _
        $region20: #{tpu_custom_call.1} parent=11 // pred_fallthru
          _
        // Predicated region
        $region21: #{tpu_custom_call.1} parent=11 // pred_check
          %p193 = pneg %p104
        $region22: #{tpu_custom_call.1} parent=11 // pred_check_branch
          %195 = sbr.rel (%p193) target = $region24
        $region23: #{tpu_custom_call.1} parent=11 // pred_region
          _
        $region24: #{tpu_custom_call.1} parent=11 // pred_fallthru
          _
        // Predicated region
        $region25: #{tpu_custom_call.1} parent=11 // pred_check
          %p196 = pneg %p125
        $region26: #{tpu_custom_call.1} parent=11 // pred_check_branch
          %198 = sbr.rel (%p196) target = $region28
        $region27: #{tpu_custom_call.1} parent=11 // pred_region
          _
        $region28: #{tpu_custom_call.1} parent=11 // pred_fallthru
          _
        // Predicated region
        $region29: #{tpu_custom_call.1} parent=11 // pred_check
          %p199 = pneg %p146
        $region30: #{tpu_custom_call.1} parent=11 // pred_check_branch
          %201 = sbr.rel (%p199) target = $region32
        $region31: #{tpu_custom_call.1} parent=11 // pred_region
          _
        $region32: #{tpu_custom_call.1} parent=11 // pred_fallthru
          _
      $region12: #{tpu_custom_call.1} parent=5 // pred_fallthru
        _
      %p202 = scmp.lt.s32.totalorder %s15, 2
      // Predicated region
      $region33: #{tpu_custom_call.1} parent=5 // pred_check
        %p203 = pneg %p202
      $region34: #{tpu_custom_call.1} parent=5 // pred_check_branch
        %205 = sbr.rel (%p203) target = $region36
      $region35: #{tpu_custom_call.1} parent=5 // pred_region
        // Predicated region
        $region37: #{tpu_custom_call.1} parent=35 // pred_check
          %p206 = pneg %p35
        $region38: #{tpu_custom_call.1} parent=35 // pred_check_branch
          %208 = sbr.rel (%p206) target = $region40
        $region39: #{tpu_custom_call.1} parent=35 // pred_region
          %p209 = scmp.lt.s32.totalorder %s15, 1
          %s210 = scalar_select %p209, %s15, 1
          %s211 = smul.addr %s210, 32
          %s212 = smul.addr %s211, 4
          %s213 = scalar_lea.vmem %s0, %s212
        $region40: #{tpu_custom_call.1} parent=35 // pred_fallthru
          _
      $region36: #{tpu_custom_call.1} parent=5 // pred_fallthru
        _
      %p214 = scmp.le.s32.totalorder 1, %s15
      %p215 = scmp.lt.s32.totalorder %s15, 3
      %p216 = pnand %p214, %p215
      %p217 = pneg %p216
      // Predicated region
      $region41: #{tpu_custom_call.1} parent=5 // pred_check
        _
      $region42: #{tpu_custom_call.1} parent=5 // pred_check_branch
        %219 = sbr.rel (%p216) target = $region44
      $region43: #{tpu_custom_call.1} parent=5 // pred_region
        %s220 = ssub.s32 %s15, 1
        %p221 = scmp.lt.s32.totalorder %s20, 1
        %s222 = scalar_select %p221, %s20, 1
        %s223 = smul.addr %s222, 32
        %s224 = smul.addr %s223, 4
        %s225 = scalar_lea.vmem %s0, %s224
        %p226 = pneg %p41
        %p227 = pneg %p38
        %p228 = pneg %p62
        %p229 = pneg %p59
        %p230 = pneg %p83
        %p231 = pneg %p80
        %p232 = pneg %p104
        %p233 = pneg %p101
        %p234 = pneg %p125
        %p235 = pneg %p122
        %p236 = pneg %p146
        %p237 = pneg %p143
        %p238 = pneg %p172
        %p239 = pneg %p169
        %s240 = sand.u32 %s159, 1
        %s241 = scalar_lea.sflag [#allocation3], %s240
        %s242 = sand.u32 %s159, 1
        %s243 = smul.addr %s242, 8
        %s244 = scalar_lea.vmem [#allocation2], %s243
        %p245 = scmp.lt.s32.totalorder %s20, 1
        %s246 = scalar_select %p245, %s20, 1
        %s247 = smul.addr %s246, 32
        %s248 = smul.addr %s247, 4
        %s249 = scalar_lea.vmem %s0, %s248
        %v251 = vld [vmem:[%s249] sm:$0xf]
        %v252 = vld [vmem:[%s249 + $0x4] sm:$0xf]
        %v253 = vld [vmem:[%s249 + $0x8] sm:$0xf]
        %v254 = vld [vmem:[%s249 + $0xc] sm:$0xf]
        %v255 = vld [vmem:[%s249 + $0x10] sm:$0xf]
        %v256 = vld [vmem:[%s249 + $0x14] sm:$0xf]
        %v257 = vld [vmem:[%s249 + $0x18] sm:$0xf]
        %v258 = vld [vmem:[%s249 + $0x1c] sm:$0xf]
        %v259 = vld [vmem:[%s249 + $0x20] sm:$0xf]
        %v260 = vld [vmem:[%s249 + $0x24] sm:$0xf]
        %v261 = vld [vmem:[%s249 + $0x28] sm:$0xf]
        %v262 = vld [vmem:[%s249 + $0x2c] sm:$0xf]
        %v263 = vld [vmem:[%s249 + $0x30] sm:$0xf]
        %v264 = vld [vmem:[%s249 + $0x34] sm:$0xf]
        %v265 = vld [vmem:[%s249 + $0x38] sm:$0xf]
        %v266 = vld [vmem:[%s249 + $0x3c] sm:$0xf]
        %v267 = vld [vmem:[%s249 + $0x40] sm:$0xf]
        %v268 = vld [vmem:[%s249 + $0x44] sm:$0xf]
        %v269 = vld [vmem:[%s249 + $0x48] sm:$0xf]
        %v270 = vld [vmem:[%s249 + $0x4c] sm:$0xf]
        %v271 = vld [vmem:[%s249 + $0x50] sm:$0xf]
        %v272 = vld [vmem:[%s249 + $0x54] sm:$0xf]
        %v273 = vld [vmem:[%s249 + $0x58] sm:$0xf]
        %v274 = vld [vmem:[%s249 + $0x5c] sm:$0xf]
        %v275 = vld [vmem:[%s249 + $0x60] sm:$0xf]
        %v276 = vld [vmem:[%s249 + $0x64] sm:$0xf]
        %v277 = vld [vmem:[%s249 + $0x68] sm:$0xf]
        %v278 = vld [vmem:[%s249 + $0x6c] sm:$0xf]
        %v279 = vld [vmem:[%s249 + $0x70] sm:$0xf]
        %v280 = vld [vmem:[%s249 + $0x74] sm:$0xf]
        %v281 = vld [vmem:[%s249 + $0x78] sm:$0xf]
        %v282 = vld [vmem:[%s249 + $0x7c] sm:$0xf]
        %v283 = vld [vmem:[%s1] sm:$0xf]
        %v284 = vld [vmem:[%s1 + $0x4] sm:$0xf]
        %v285 = vld [vmem:[%s1 + $0x8] sm:$0xf]
        %v286 = vld [vmem:[%s1 + $0xc] sm:$0xf]
        %v287 = vld [vmem:[%s1 + $0x10] sm:$0x3]
        %v288 = vld [vmem:[%s2] sm:$0x1]
        %v290 = vlaneseq
        %v291 = vshrl.u32 %v290, 7
        %v292 = vsub.s32 0, %v291
        %v293 = vrot.slane %v288, %v292
        %v327 = vunpack.c.l.b16 %v251
        %v328 = vunpack.c.l.b16 %v252
        %v329 = vunpack.c.l.b16 %v253
        %v330 = vunpack.c.l.b16 %v254
        %v331 = vunpack.c.l.b16 %v255
        %v332 = vunpack.c.l.b16 %v256
        %v333 = vunpack.c.l.b16 %v257
        %v334 = vunpack.c.l.b16 %v258
        %v335 = vunpack.c.l.b16 %v259
        %v336 = vunpack.c.l.b16 %v260
        %v337 = vunpack.c.l.b16 %v261
        %v338 = vunpack.c.l.b16 %v262
        %v339 = vunpack.c.l.b16 %v263
        %v340 = vunpack.c.l.b16 %v264
        %v341 = vunpack.c.l.b16 %v265
        %v342 = vunpack.c.l.b16 %v266
        %v343 = vunpack.c.l.b16 %v267
        %v344 = vunpack.c.l.b16 %v268
        %v345 = vunpack.c.l.b16 %v269
        %v346 = vunpack.c.l.b16 %v270
        %v347 = vunpack.c.l.b16 %v271
        %v348 = vunpack.c.l.b16 %v272
        %v349 = vunpack.c.l.b16 %v273
        %v350 = vunpack.c.l.b16 %v274
        %v351 = vunpack.c.l.b16 %v275
        %v352 = vunpack.c.l.b16 %v276
        %v353 = vunpack.c.l.b16 %v277
        %v354 = vunpack.c.l.b16 %v278
        %v355 = vunpack.c.l.b16 %v279
        %v356 = vunpack.c.l.b16 %v280
        %v357 = vunpack.c.l.b16 %v281
        %v358 = vunpack.c.l.b16 %v282
        %v359 = vpack.c.b16 %v328, %v327
        %v360 = vpack.c.b16 %v330, %v329
        %v361 = vpack.c.b16 %v332, %v331
        %v362 = vpack.c.b16 %v334, %v333
        %v363 = vpack.c.b16 %v336, %v335
        %v364 = vpack.c.b16 %v338, %v337
        %v365 = vpack.c.b16 %v340, %v339
        %v366 = vpack.c.b16 %v342, %v341
        %v367 = vpack.c.b16 %v344, %v343
        %v368 = vpack.c.b16 %v346, %v345
        %v369 = vpack.c.b16 %v348, %v347
        %v370 = vpack.c.b16 %v350, %v349
        %v371 = vpack.c.b16 %v352, %v351
        %v372 = vpack.c.b16 %v354, %v353
        %v373 = vpack.c.b16 %v356, %v355
        %v374 = vpack.c.b16 %v358, %v357
        %v380 = vunpack.c.l.b16 %v283
        %v381 = vunpack.c.l.b16 %v284
        %v382 = vunpack.c.l.b16 %v285
        %v383 = vunpack.c.l.b16 %v286
        %v384 = vunpack.c.l.b16 %v287
        %v385 = vpack.c.b16 %v381, %v380
        %v386 = vpack.c.b16 %v383, %v382
        %v387 = vpack.c.b16 %v384, %v384
        %vm390 = vcmask 293888
        %v392 = vsel %vm390, %v359, 0
        %v395 = vsel %vm390, %v360, 0
        %v398 = vsel %vm390, %v361, 0
        %v401 = vsel %vm390, %v362, 0
        %v404 = vsel %vm390, %v363, 0
        %v407 = vsel %vm390, %v364, 0
        %v410 = vsel %vm390, %v365, 0
        %v413 = vsel %vm390, %v366, 0
        %v416 = vsel %vm390, %v367, 0
        %v419 = vsel %vm390, %v368, 0
        %v422 = vsel %vm390, %v369, 0
        %v425 = vsel %vm390, %v370, 0
        %v428 = vsel %vm390, %v371, 0
        %v431 = vsel %vm390, %v372, 0
        %v434 = vsel %vm390, %v373, 0
        %v437 = vsel %vm390, %v374, 0
        %vm439 = vcmask 1041408
        %v441 = vsel %vm439, %v387, 0
        %443 = vmatprep.subr.bf16.mxu0 0
        %444 = vmatpush1.bf16.msra.mxu0 0
        %445 = vmatprep.subr.bf16.mxu0 0
        %446 = vmatpush1.bf16.msra.mxu0 0
        %447 = vmatprep.subr.bf16.mxu0 0
        %448 = vmatpush1.bf16.msra.mxu0 0
        %449 = vmatprep.subr.bf16.mxu0 0
        %450 = vmatpush1.bf16.msra.mxu0 0
        %451 = vmatprep.subr.bf16.mxu0 0
        %452 = vmatpush1.bf16.msra.mxu0 0
        %453 = vmatprep.subr.bf16.mxu0 0
        %454 = vmatpush1.bf16.msra.mxu0 %v441
        %455 = vmatprep.subr.bf16.mxu0 0
        %456 = vmatpush1.bf16.msra.mxu0 %v386
        %457 = vmatprep.subr.bf16.mxu0 0
        %458 = vmatpush1.bf16.msra.mxu0 %v385
        %459 = vmatprep.subr.bf16.mxu0 0
        %460 = vmatpush2.bf16.msra.mxu0 0
        %461 = vmatprep.subr.bf16.mxu0 0
        %462 = vmatpush2.bf16.msra.mxu0 0
        %463 = vmatprep.subr.bf16.mxu0 0
        %464 = vmatpush2.bf16.msra.mxu0 0
        %465 = vmatprep.subr.bf16.mxu0 0
        %466 = vmatpush2.bf16.msra.mxu0 0
        %467 = vmatprep.subr.bf16.mxu0 0
        %468 = vmatpush2.bf16.msra.mxu0 0
        %469 = vmatprep.subr.bf16.mxu0 0
        %470 = vmatpush2.bf16.msra.mxu0 0
        %471 = vmatprep.subr.bf16.mxu0 0
        %472 = vmatpush2.bf16.msra.mxu0 0
        %473 = vmatprep.subr.bf16.mxu0 0
        %474 = vmatpush2.bf16.msra.mxu0 0
        %475 = vmatprep.mubr.bf16.mxu0 0
        %476 = vmatmul.mubr.bf16.gmra.mxu0 %v392
        %v477 = vpop.f32.mrf.mxu0
        %v478 = vadd.f32 %v293, %v477
        %v479 = vpop.f32.mrf.mxu0
        %v480 = vpop.f32.mrf.mxu0
        %v481 = vadd.f32 %v293, %v480
        %v482 = vpop.f32.mrf.mxu0
        %483 = vmatprep.mubr.bf16.mxu0 0
        %484 = vmatmul.mubr.bf16.gmra.mxu0 %v395
        %v485 = vpop.f32.mrf.mxu0
        %v486 = vadd.f32 %v293, %v485
        %v487 = vpop.f32.mrf.mxu0
        %v488 = vpop.f32.mrf.mxu0
        %v489 = vadd.f32 %v293, %v488
        %v490 = vpop.f32.mrf.mxu0
        %491 = vmatprep.mubr.bf16.mxu0 0
        %492 = vmatmul.mubr.bf16.gmra.mxu0 %v398
        %v493 = vpop.f32.mrf.mxu0
        %v494 = vadd.f32 %v293, %v493
        %v495 = vpop.f32.mrf.mxu0
        %v496 = vpop.f32.mrf.mxu0
        %v497 = vadd.f32 %v293, %v496
        %v498 = vpop.f32.mrf.mxu0
        %499 = vmatprep.mubr.bf16.mxu0 0
        %500 = vmatmul.mubr.bf16.gmra.mxu0 %v401
        %v501 = vpop.f32.mrf.mxu0
        %v502 = vadd.f32 %v293, %v501
        %v503 = vpop.f32.mrf.mxu0
        %v504 = vpop.f32.mrf.mxu0
        %v505 = vadd.f32 %v293, %v504
        %v506 = vpop.f32.mrf.mxu0
        %507 = vmatprep.mubr.bf16.mxu0 0
        %508 = vmatmul.mubr.bf16.gmra.mxu0 %v404
        %v509 = vpop.f32.mrf.mxu0
        %v510 = vadd.f32 %v293, %v509
        %v511 = vpop.f32.mrf.mxu0
        %v512 = vpop.f32.mrf.mxu0
        %v513 = vadd.f32 %v293, %v512
        %v514 = vpop.f32.mrf.mxu0
        %515 = vmatprep.mubr.bf16.mxu0 0
        %516 = vmatmul.mubr.bf16.gmra.mxu0 %v407
        %v517 = vpop.f32.mrf.mxu0
        %v518 = vadd.f32 %v293, %v517
        %v519 = vpop.f32.mrf.mxu0
        %v520 = vpop.f32.mrf.mxu0
        %v521 = vadd.f32 %v293, %v520
        %v522 = vpop.f32.mrf.mxu0
        %523 = vmatprep.mubr.bf16.mxu0 0
        %524 = vmatmul.mubr.bf16.gmra.mxu0 %v410
        %v525 = vpop.f32.mrf.mxu0
        %v526 = vadd.f32 %v293, %v525
        %v527 = vpop.f32.mrf.mxu0
        %v528 = vpop.f32.mrf.mxu0
        %v529 = vadd.f32 %v293, %v528
        %v530 = vpop.f32.mrf.mxu0
        %531 = vmatprep.mubr.bf16.mxu0 0
        %532 = vmatmul.mubr.bf16.gmra.mxu0 %v413
        %v533 = vpop.f32.mrf.mxu0
        %v534 = vadd.f32 %v293, %v533
        %v535 = vpop.f32.mrf.mxu0
        %v536 = vpop.f32.mrf.mxu0
        %v537 = vadd.f32 %v293, %v536
        %v538 = vpop.f32.mrf.mxu0
        %539 = vmatprep.mubr.bf16.mxu0 0
        %540 = vmatmul.mubr.bf16.gmra.mxu0 %v416
        %v541 = vpop.f32.mrf.mxu0
        %v542 = vadd.f32 %v293, %v541
        %v543 = vpop.f32.mrf.mxu0
        %v544 = vpop.f32.mrf.mxu0
        %v545 = vadd.f32 %v293, %v544
        %v546 = vpop.f32.mrf.mxu0
        %547 = vmatprep.mubr.bf16.mxu0 0
        %548 = vmatmul.mubr.bf16.gmra.mxu0 %v419
        %v549 = vpop.f32.mrf.mxu0
        %v550 = vadd.f32 %v293, %v549
        %v551 = vpop.f32.mrf.mxu0
        %v552 = vpop.f32.mrf.mxu0
        %v553 = vadd.f32 %v293, %v552
        %v554 = vpop.f32.mrf.mxu0
        %555 = vmatprep.mubr.bf16.mxu0 0
        %556 = vmatmul.mubr.bf16.gmra.mxu0 %v422
        %v557 = vpop.f32.mrf.mxu0
        %v558 = vadd.f32 %v293, %v557
        %v559 = vpop.f32.mrf.mxu0
        %v560 = vpop.f32.mrf.mxu0
        %v561 = vadd.f32 %v293, %v560
        %v562 = vpop.f32.mrf.mxu0
        %563 = vmatprep.mubr.bf16.mxu0 0
        %564 = vmatmul.mubr.bf16.gmra.mxu0 %v425
        %v565 = vpop.f32.mrf.mxu0
        %v566 = vadd.f32 %v293, %v565
        %v567 = vpop.f32.mrf.mxu0
        %v568 = vpop.f32.mrf.mxu0
        %v569 = vadd.f32 %v293, %v568
        %v570 = vpop.f32.mrf.mxu0
        %571 = vmatprep.mubr.bf16.mxu0 0
        %572 = vmatmul.mubr.bf16.gmra.mxu0 %v428
        %v573 = vpop.f32.mrf.mxu0
        %v574 = vadd.f32 %v293, %v573
        %v575 = vpop.f32.mrf.mxu0
        %v576 = vpop.f32.mrf.mxu0
        %v577 = vadd.f32 %v293, %v576
        %v578 = vpop.f32.mrf.mxu0
        %579 = vmatprep.mubr.bf16.mxu0 0
        %580 = vmatmul.mubr.bf16.gmra.mxu0 %v431
        %v581 = vpop.f32.mrf.mxu0
        %v582 = vadd.f32 %v293, %v581
        %v583 = vpop.f32.mrf.mxu0
        %v584 = vpop.f32.mrf.mxu0
        %v585 = vadd.f32 %v293, %v584
        %v586 = vpop.f32.mrf.mxu0
        %587 = vmatprep.mubr.bf16.mxu0 0
        %588 = vmatmul.mubr.bf16.gmra.mxu0 %v434
        %v589 = vpop.f32.mrf.mxu0
        %v590 = vadd.f32 %v293, %v589
        %v591 = vpop.f32.mrf.mxu0
        %v592 = vpop.f32.mrf.mxu0
        %v593 = vadd.f32 %v293, %v592
        %v594 = vpop.f32.mrf.mxu0
        %595 = vmatprep.mubr.bf16.mxu0 0
        %596 = vmatmul.mubr.bf16.gmra.mxu0 %v437
        %v597 = vpop.f32.mrf.mxu0
        %v598 = vadd.f32 %v293, %v597
        %v599 = vpop.f32.mrf.mxu0
        %v600 = vpop.f32.mrf.mxu0
        %v601 = vadd.f32 %v293, %v600
        %v602 = vpop.f32.mrf.mxu0
        %603 = vdwg.mxu0
        %v604 = vmax.f32 %v478, 0.0
        %v605 = vmax.f32 %v481, 0.0
        %v606 = vmax.f32 %v486, 0.0
        %v607 = vmax.f32 %v489, 0.0
        %v608 = vmax.f32 %v494, 0.0
        %v609 = vmax.f32 %v497, 0.0
        %v610 = vmax.f32 %v502, 0.0
        %v611 = vmax.f32 %v505, 0.0
        %v612 = vmax.f32 %v510, 0.0
        %v613 = vmax.f32 %v513, 0.0
        %v614 = vmax.f32 %v518, 0.0
        %v615 = vmax.f32 %v521, 0.0
        %v616 = vmax.f32 %v526, 0.0
        %v617 = vmax.f32 %v529, 0.0
        %v618 = vmax.f32 %v534, 0.0
        %v619 = vmax.f32 %v537, 0.0
        %v620 = vmax.f32 %v542, 0.0
        %v621 = vmax.f32 %v545, 0.0
        %v622 = vmax.f32 %v550, 0.0
        %v623 = vmax.f32 %v553, 0.0
        %v624 = vmax.f32 %v558, 0.0
        %v625 = vmax.f32 %v561, 0.0
        %v626 = vmax.f32 %v566, 0.0
        %v627 = vmax.f32 %v569, 0.0
        %v628 = vmax.f32 %v574, 0.0
        %v629 = vmax.f32 %v577, 0.0
        %v630 = vmax.f32 %v582, 0.0
        %v631 = vmax.f32 %v585, 0.0
        %v632 = vmax.f32 %v590, 0.0
        %v633 = vmax.f32 %v593, 0.0
        %v634 = vmax.f32 %v598, 0.0
        %v635 = vmax.f32 %v601, 0.0
        %v636 = vld [vmem:[%s3] sm:$0xff]
        %v637 = vld [vmem:[%s3 + $0x8] sm:$0xff]
        %638 = vmatprep.subr.mxu0 0.0
        %639 = vmatpush1.msra.mxu0 %v619
        %640 = vmatprep.subr.mxu0 0.0
        %641 = vmatpush1.msra.mxu0 %v618
        %642 = vmatprep.subr.mxu0 0.0
        %643 = vmatpush1.msra.mxu0 %v617
        %644 = vmatprep.subr.mxu0 0.0
        %645 = vmatpush1.msra.mxu0 %v616
        %646 = vmatprep.subr.mxu0 0.0
        %647 = vmatpush1.msra.mxu0 %v615
        %648 = vmatprep.subr.mxu0 0.0
        %649 = vmatpush1.msra.mxu0 %v614
        %650 = vmatprep.subr.mxu0 0.0
        %651 = vmatpush1.msra.mxu0 %v613
        %652 = vmatprep.subr.mxu0 0.0
        %653 = vmatpush1.msra.mxu0 %v612
        %654 = vmatprep.subr.mxu0 0.0
        %655 = vmatpush1.msra.mxu0 %v611
        %656 = vmatprep.subr.mxu0 0.0
        %657 = vmatpush1.msra.mxu0 %v610
        %658 = vmatprep.subr.mxu0 0.0
        %659 = vmatpush1.msra.mxu0 %v609
        %660 = vmatprep.subr.mxu0 0.0
        %661 = vmatpush1.msra.mxu0 %v608
        %662 = vmatprep.subr.mxu0 0.0
        %663 = vmatpush1.msra.mxu0 %v607
        %664 = vmatprep.subr.mxu0 0.0
        %665 = vmatpush1.msra.mxu0 %v606
        %666 = vmatprep.subr.mxu0 0.0
        %667 = vmatpush1.msra.mxu0 %v605
        %668 = vmatprep.subr.mxu0 0.0
        %669 = vmatpush1.msra.mxu0 %v604
        %670 = vmatprep.subr.mxu0 0.0
        %671 = vmatpush2.msra.mxu0 %v635
        %672 = vmatprep.subr.mxu0 0.0
        %673 = vmatpush2.msra.mxu0 %v634
        %674 = vmatprep.subr.mxu0 0.0
        %675 = vmatpush2.msra.mxu0 %v633
        %676 = vmatprep.subr.mxu0 0.0
        %677 = vmatpush2.msra.mxu0 %v632
        %678 = vmatprep.subr.mxu0 0.0
        %679 = vmatpush2.msra.mxu0 %v631
        %680 = vmatprep.subr.mxu0 0.0
        %681 = vmatpush2.msra.mxu0 %v630
        %682 = vmatprep.subr.mxu0 0.0
        %683 = vmatpush2.msra.mxu0 %v629
        %684 = vmatprep.subr.mxu0 0.0
        %685 = vmatpush2.msra.mxu0 %v628
        %686 = vmatprep.subr.mxu0 0.0
        %687 = vmatpush2.msra.mxu0 %v627
        %688 = vmatprep.subr.mxu0 0.0
        %689 = vmatpush2.msra.mxu0 %v626
        %690 = vmatprep.subr.mxu0 0.0
        %691 = vmatpush2.msra.mxu0 %v625
        %692 = vmatprep.subr.mxu0 0.0
        %693 = vmatpush2.msra.mxu0 %v624
        %694 = vmatprep.subr.mxu0 0.0
        %695 = vmatpush2.msra.mxu0 %v623
        %696 = vmatprep.subr.mxu0 0.0
        %697 = vmatpush2.msra.mxu0 %v622
        %698 = vmatprep.subr.mxu0 0.0
        %699 = vmatpush2.msra.mxu0 %v621
        %700 = vmatprep.subr.mxu0 0.0
        %701 = vmatpush2.msra.mxu0 %v620
        %702 = vmatprep.mubr.f32.mxu0 %v637
        %703 = vmatmul.mubr.f32.gmra.mxu0 %v636
        %v704 = vpop.f32.mrf.mxu0
        %v705 = vadd.f32 0.0, %v704
        %v706 = vpop.f32.mrf.mxu0
        %707 = vdwg.mxu0
        %v708 = vld [vmem:[%s4] sm:$0xff]
        %v709 = vld [vmem:[%s4 + $0x8] sm:$0xff]
        %v710 = vld [vmem:[%s4 + $0x10] sm:$0xff]
        %v711 = vld [vmem:[%s4 + $0x18] sm:$0xff]
        %v712 = vld [vmem:[%s4 + $0x20] sm:$0xff]
        %v713 = vld [vmem:[%s4 + $0x28] sm:$0xff]
        %v714 = vld [vmem:[%s4 + $0x30] sm:$0xff]
        %v715 = vld [vmem:[%s4 + $0x38] sm:$0xff]
        %v716 = vld [vmem:[%s4 + $0x40] sm:$0xff]
        %v717 = vld [vmem:[%s4 + $0x48] sm:$0xff]
        %v718 = vld [vmem:[%s4 + $0x50] sm:$0xff]
        %v719 = vld [vmem:[%s4 + $0x58] sm:$0xff]
        %v720 = vld [vmem:[%s4 + $0x60] sm:$0xff]
        %v721 = vld [vmem:[%s4 + $0x68] sm:$0xff]
        %v722 = vld [vmem:[%s4 + $0x70] sm:$0xff]
        %v723 = vld [vmem:[%s4 + $0x78] sm:$0xff]
        %v724 = vld [vmem:[%s5] sm:$0x1]
        %v726 = vlaneseq
        %v727 = vshrl.u32 %v726, 7
        %v728 = vsub.s32 0, %v727
        %v729 = vrot.slane %v724, %v728
        %731 = vmatprep.subr.mxu0 0.0
        %732 = vmatpush1.msra.mxu0 %v723
        %733 = vmatprep.subr.mxu0 0.0
        %734 = vmatpush1.msra.mxu0 %v722
        %735 = vmatprep.subr.mxu0 0.0
        %736 = vmatpush1.msra.mxu0 %v721
        %737 = vmatprep.subr.mxu0 0.0
        %738 = vmatpush1.msra.mxu0 %v720
        %739 = vmatprep.subr.mxu0 0.0
        %740 = vmatpush1.msra.mxu0 %v719
        %741 = vmatprep.subr.mxu0 0.0
        %742 = vmatpush1.msra.mxu0 %v718
        %743 = vmatprep.subr.mxu0 0.0
        %744 = vmatpush1.msra.mxu0 %v717
        %745 = vmatprep.subr.mxu0 0.0
        %746 = vmatpush1.msra.mxu0 %v716
        %747 = vmatprep.subr.mxu0 0.0
        %748 = vmatpush1.msra.mxu0 %v715
        %749 = vmatprep.subr.mxu0 0.0
        %750 = vmatpush1.msra.mxu0 %v714
        %751 = vmatprep.subr.mxu0 0.0
        %752 = vmatpush1.msra.mxu0 %v713
        %753 = vmatprep.subr.mxu0 0.0
        %754 = vmatpush1.msra.mxu0 %v712
        %755 = vmatprep.subr.mxu0 0.0
        %756 = vmatpush1.msra.mxu0 %v711
        %757 = vmatprep.subr.mxu0 0.0
        %758 = vmatpush1.msra.mxu0 %v710
        %759 = vmatprep.subr.mxu0 0.0
        %760 = vmatpush1.msra.mxu0 %v709
        %761 = vmatprep.subr.mxu0 0.0
        %762 = vmatpush1.msra.mxu0 %v708
        %763 = vmatprep.subr.mxu0 0.0
        %764 = vmatpush2.msra.mxu0 0.0
        %765 = vmatprep.subr.mxu0 0.0
        %766 = vmatpush2.msra.mxu0 0.0
        %767 = vmatprep.subr.mxu0 0.0
        %768 = vmatpush2.msra.mxu0 0.0
        %769 = vmatprep.subr.mxu0 0.0
        %770 = vmatpush2.msra.mxu0 0.0
        %771 = vmatprep.subr.mxu0 0.0
        %772 = vmatpush2.msra.mxu0 0.0
        %773 = vmatprep.subr.mxu0 0.0
        %774 = vmatpush2.msra.mxu0 0.0
        %775 = vmatprep.subr.mxu0 0.0
        %776 = vmatpush2.msra.mxu0 0.0
        %777 = vmatprep.subr.mxu0 0.0
        %778 = vmatpush2.msra.mxu0 0.0
        %779 = vmatprep.subr.mxu0 0.0
        %780 = vmatpush2.msra.mxu0 0.0
        %781 = vmatprep.subr.mxu0 0.0
        %782 = vmatpush2.msra.mxu0 0.0
        %783 = vmatprep.subr.mxu0 0.0
        %784 = vmatpush2.msra.mxu0 0.0
        %785 = vmatprep.subr.mxu0 0.0
        %786 = vmatpush2.msra.mxu0 0.0
        %787 = vmatprep.subr.mxu0 0.0
        %788 = vmatpush2.msra.mxu0 0.0
        %789 = vmatprep.subr.mxu0 0.0
        %790 = vmatpush2.msra.mxu0 0.0
        %791 = vmatprep.subr.mxu0 0.0
        %792 = vmatpush2.msra.mxu0 0.0
        %793 = vmatprep.subr.mxu0 0.0
        %794 = vmatpush2.msra.mxu0 0.0
        %795 = vmatprep.mubr.f32.mxu0 0.0
        %796 = vmatmul.mubr.f32.gmra.mxu0 %v705
        %v797 = vpop.f32.mrf.mxu0
        %v798 = vadd.f32 %v729, %v797
        %v799 = vpop.f32.mrf.mxu0
        %800 = vdwg.mxu0
        %801 = vst [vmem:[%s244] sm:$0xff] %v798
        %s802 = sand.u32 %s159, 1
        %s803 = scalar_lea.sflag [#allocation3], %s802
        %s804 = sand.u32 %s159, 1
        %s805 = smul.addr %s804, 8
        %s806 = scalar_lea.vmem [#allocation2], %s805
        // Predicated region
        $region45: #{tpu_custom_call.1} parent=43 // pred_check
          %p807 = pneg %p169
        $region46: #{tpu_custom_call.1} parent=43 // pred_check_branch
          %809 = sbr.rel (%p807) target = $region48
        $region47: #{tpu_custom_call.1} parent=43 // pred_region
          %s811 = ssub.s32 128, 128
          %812 = vsyncadd %s803, %s811
          %s813 = smul.addr %s20, 128
          %s814 = scalar_lea.hbm %s6, %s813
          %s816 = sshll.u32 %s806, 4
          %s817 = int_to_ptr.vmem [resolvable:$true] %s816
          %819 = dma.vmem_to_hbm [thread:$0]  %s817, 128, %s814, %s803
        $region48: #{tpu_custom_call.1} parent=43 // pred_fallthru
          _
      $region44: #{tpu_custom_call.1} parent=5 // pred_fallthru
        _
      %p820 = scmp.le.s32.totalorder 2, %s15
      // Predicated region
      $region49: #{tpu_custom_call.1} parent=5 // pred_check
        %p821 = pneg %p820
      $region50: #{tpu_custom_call.1} parent=5 // pred_check_branch
        %823 = sbr.rel (%p821) target = $region52
      $region51: #{tpu_custom_call.1} parent=5 // pred_region
        %s824 = ssub.s32 %s15, 2
        // Predicated region
        $region53: #{tpu_custom_call.1} parent=51 // pred_check
          %p825 = pneg %p175
        $region54: #{tpu_custom_call.1} parent=51 // pred_check_branch
          %827 = sbr.rel (%p825) target = $region56
        $region55: #{tpu_custom_call.1} parent=51 // pred_region
          %s828 = sand.u32 %s160, 1
          %s829 = scalar_lea.sflag [#allocation3], %s828
          %s830 = sand.u32 %s160, 1
          %s831 = smul.addr %s830, 8
          %s832 = scalar_lea.vmem [#allocation2], %s831
          %833 = dma.done %s829, 128
        $region56: #{tpu_custom_call.1} parent=51 // pred_fallthru
          _
      $region52: #{tpu_custom_call.1} parent=5 // pred_fallthru
        _
    $region6: #{tpu_custom_call.1} parent=1 // loop_footer
      %s19 = sadd.s32 1, %s15
    $region7: #{tpu_custom_call.1} parent=1 // loop_footer_branch
      %14 = sbr.rel target = $region3
    $region8: #{tpu_custom_call.1} parent=1 // loop_exit
      _
    %834 = vsyncpa [#allocation3], 1
    %s835 = scalar_lea.sflag [#allocation3], 1
    %836 = vsyncpa %s835, 1

</llo_original>
